<compile_context>
chip_gen: v5e
topology: v5e:2x2
jax: 0.10.0
libtpu: 0.0.40
codegen_flags: <defaults>
</compile_context>

<pallas_src>
import functools

import jax
import jax.numpy as jnp
from jax.experimental import pallas as pl
from jax.experimental.pallas import tpu as pltpu


def _softplus(x):
    # Threshold-guarded softplus: identical to log1p(exp(x)) to f32 precision,
    # but never overflows for large x.
    return jnp.where(x > 20.0, x, jnp.log1p(jnp.exp(jnp.minimum(x, 20.0))))


def _bnn_kl_kernel(x_ref, w1_ref, w2_ref, out_ref):
    """x_ref: [tile_b, in] ; w1_ref: [hidden, in] bf16 ; w2_ref: [out, hidden] bf16
       out_ref: [out, tile_b] f32  (batch on the lane axis everywhere)."""
    # ---- layer 1: h = w1 @ x.T  -> [hidden, tile_b]  (contract input_dim) ----
    h = jax.lax.dot_general(
        w1_ref[...], x_ref[...].astype(jnp.bfloat16),
        dimension_numbers=(((1,), (1,)), ((), ())),
        preferred_element_type=jnp.float32)
    h = jnp.maximum(h, 0.0)

    # ---- layer 2: logits = w2 @ h -> [out, tile_b]  (contract hidden_dim) ----
    logits = jax.lax.dot_general(
        w2_ref[...], h.astype(jnp.bfloat16),
        dimension_numbers=(((1,), (0,)), ((), ())),
        preferred_element_type=jnp.float32)

    # sigmoid(x) == 0.5 * (tanh(x/2) + 1): EUP tanh, avoids a VALU divide.
    out_ref[...] = (0.5 * (jnp.tanh(0.5 * logits) + 1.0)).astype(out_ref.dtype)


def _pick_tile_b(batch, requested):
    """Batch tile: multiple of 128, capped at 2048 (and at the padded batch).
    Prefers (1) a tile that divides `batch` exactly (skips the jnp.pad pass over
    x) with an even grid length >= 2 (v7x megacore split), then (2) any dividing
    tile, then (3) falls back to padding for ragged batches."""
    padded = ((batch + 127) // 128) * 128
    cap = min(requested if requested is not None else 1024, 2048, padded)
    cap = max(128, (cap // 128) * 128)
    if batch % 128 == 0:
        best_divisor = None
        for t in range(cap, 127, -128):
            if batch % t == 0:
                gb = batch // t
                if gb >= 2 and gb % 2 == 0:
                    return t                # fattest tile with an even grid
                if best_divisor is None:
                    best_divisor = t        # fattest dividing tile
        if best_divisor is not None:
            return best_divisor
    # TODO(synk): ragged tail could use a masked final block instead of jnp.pad.
    return cap


@functools.partial(jax.jit, static_argnames=("tile_b",))
def bnn_kl_forward(x, mu1, rho1, eps1, mu2, rho2, eps2, *, tile_b=None):
    batch, input_dim = x.shape
    hidden_dim = mu1.shape[0]
    output_dim = mu2.shape[0]

    # ---- hoisted weight reparameterization (computed once, tiny) ----
    w1 = (mu1 + _softplus(rho1) * eps1).astype(jnp.bfloat16)   # [hidden, in]
    w2 = (mu2 + _softplus(rho2) * eps2).astype(jnp.bfloat16)   # [out, hidden]

    tile_b = _pick_tile_b(batch, tile_b)
    grid_b = pl.cdiv(batch, tile_b)
    padded_b = grid_b * tile_b
    if padded_b != batch:
        # Fallback only (demo shapes never hit this): extra HBM pass over x.
        x = jnp.pad(x, ((0, padded_b - batch), (0, 0)))

    # Resident weight tensors: same block every grid step -> DMA'd once.
    w1_spec = pl.BlockSpec((hidden_dim, input_dim), lambda i: (0, 0))
    w2_spec = pl.BlockSpec((output_dim, hidden_dim), lambda i: (0, 0))

    flops = 2 * padded_b * (input_dim * hidden_dim + hidden_dim * output_dim)
    transcendentals = padded_b * output_dim   # sigmoid-as-tanh only
    bytes_accessed = (padded_b * input_dim * x.dtype.itemsize
                      + 2 * hidden_dim * input_dim
                      + 2 * output_dim * hidden_dim
                      + 4 * padded_b * output_dim)

    out_t = pl.pallas_call(
        _bnn_kl_kernel,
        out_shape=jax.ShapeDtypeStruct((output_dim, padded_b), jnp.float32),
        grid_spec=pltpu.PrefetchScalarGridSpec(
            num_scalar_prefetch=0,
            grid=(grid_b,),
            in_specs=[
                pl.BlockSpec((tile_b, input_dim), lambda i: (i, 0)),
                w1_spec,
                w2_spec,
            ],
            # Lane-dense output: last (lane) dim is the batch tile.
            out_specs=pl.BlockSpec((output_dim, tile_b), lambda i: (0, i)),
        ),
        compiler_params=pltpu.CompilerParams(
            dimension_semantics=("parallel",)),
        cost_estimate=pl.CostEstimate(
            flops=flops,
            transcendentals=transcendentals,
            bytes_accessed=bytes_accessed),
    )(x, w1, w2)

    # Single cheap transpose of the [out, batch] slab back to [batch, out].
    return out_t[:, :batch].T


def reference_forward(x, mu1, rho1, eps1, mu2, rho2, eps2):
    # Plain-JAX reference mirroring the kernel's numerics (f32 reparam,
    # bf16 MXU operands with f32 accumulation, f32 activations).
    dn = (((1,), (1,)), ((), ()))
    w1 = (mu1 + _softplus(rho1) * eps1).astype(jnp.bfloat16)
    w2 = (mu2 + _softplus(rho2) * eps2).astype(jnp.bfloat16)
    h = jax.lax.dot_general(x.astype(jnp.bfloat16), w1,
                            dimension_numbers=dn, preferred_element_type=jnp.float32)
    h = jnp.maximum(h, 0.0)
    logits = jax.lax.dot_general(h.astype(jnp.bfloat16), w2,
                                 dimension_numbers=dn, preferred_element_type=jnp.float32)
    return jax.nn.sigmoid(logits)


if __name__ == "__main__":
    # Shapes consistent with BNN_KL(input_dim, hidden_dim, output_dim); batch of
    # 256 exercises a 2-step parallel batch grid (tile_b=128 chosen automatically,
    # even grid for v7x megacore, no padding pass).
    batch, input_dim, hidden_dim, output_dim = 256, 32, 64, 8

    key = jax.random.PRNGKey(0)
    k_x, k_mu1, k_rho1, k_eps1, k_mu2, k_rho2, k_eps2 = jax.random.split(key, 7)

    x = jax.random.normal(k_x, (batch, input_dim), dtype=jnp.float32)

    # Deterministic init matching __init__: mu = randn*0.1, rho = randn*(-3.0).
    mu1 = jax.random.normal(k_mu1, (hidden_dim, input_dim), dtype=jnp.float32) * 0.1
    rho1 = jax.random.normal(k_rho1, (hidden_dim, input_dim), dtype=jnp.float32) * -3.0
    mu2 = jax.random.normal(k_mu2, (output_dim, hidden_dim), dtype=jnp.float32) * 0.1
    rho2 = jax.random.normal(k_rho2, (output_dim, hidden_dim), dtype=jnp.float32) * -3.0

    # eps = torch.randn_like(std), sampled once per forward and passed in.
    eps1 = jax.random.normal(k_eps1, (hidden_dim, input_dim), dtype=jnp.float32)
    eps2 = jax.random.normal(k_eps2, (output_dim, hidden_dim), dtype=jnp.float32)

    out = bnn_kl_forward(x, mu1, rho1, eps1, mu2, rho2, eps2)
    out = jax.block_until_ready(out)

    ref = reference_forward(x, mu1, rho1, eps1, mu2, rho2, eps2)
    assert out.shape == (batch, output_dim)
    assert jnp.allclose(out, ref, atol=1e-3, rtol=1e-3), "mismatch vs reference"

    print("KERNEL_OK")
</pallas_src>

<mosaic_0001>
module attributes {stable_mosaic.version = 11 : i64} {
  func.func @_bnn_kl_kernel(%arg0: i32, %arg1: memref<128x32xf32, #tpu.memory_space<vmem>>, %arg2: memref<64x32xbf16, #tpu.memory_space<vmem>>, %arg3: memref<8x64xbf16, #tpu.memory_space<vmem>>, %arg4: memref<8x128xf32, #tpu.memory_space<vmem>>) attributes {dimension_semantics = [#tpu.dimension_semantics<parallel>], iteration_bounds = array<i64: 2>, scalar_prefetch = 0 : i64, scratch_operands = 0 : i64, tpu.core_type = #tpu.core_type<tc>, window_params = [{transform_indices = @transform_0, window_bounds = array<i64: 128, 32>}, {pipeline_mode = #tpu.pipeline_mode<synchronous>, transform_indices = @transform_1, window_bounds = array<i64: 64, 32>}, {pipeline_mode = #tpu.pipeline_mode<synchronous>, transform_indices = @transform_2, window_bounds = array<i64: 8, 64>}, {transform_indices = @transform_3, window_bounds = array<i64: 8, 128>}]} {
    %c0 = arith.constant 0 : index
    %c0_0 = arith.constant 0 : index
    %0 = vector.load %arg2[%c0, %c0_0] : memref<64x32xbf16, #tpu.memory_space<vmem>>, vector<64x32xbf16>
    %c0_1 = arith.constant 0 : index
    %c0_2 = arith.constant 0 : index
    %1 = vector.load %arg1[%c0_1, %c0_2] : memref<128x32xf32, #tpu.memory_space<vmem>>, vector<128x32xf32>
    %2 = arith.truncf %1 : vector<128x32xf32> to vector<128x32xbf16>
    %cst = arith.constant dense<0.000000e+00> : vector<64x128xf32>
    %3 = tpu.matmul %0, %2, %cst {dimension_numbers = #tpu.dot_dimension_numbers<[1], [1], [0], [0], [0, 0, 1, 0], [], []>} : vector<64x32xbf16>, vector<128x32xbf16>, vector<64x128xf32> -> vector<64x128xf32>
    %cst_3 = arith.constant 0.000000e+00 : f32
    %4 = vector.broadcast %cst_3 : f32 to vector<64x128xf32>
    %5 = arith.maximumf %3, %4 : vector<64x128xf32>
    %c0_4 = arith.constant 0 : index
    %c0_5 = arith.constant 0 : index
    %6 = vector.load %arg3[%c0_4, %c0_5] : memref<8x64xbf16, #tpu.memory_space<vmem>>, vector<8x64xbf16>
    %7 = arith.truncf %5 : vector<64x128xf32> to vector<64x128xbf16>
    %cst_6 = arith.constant dense<0.000000e+00> : vector<8x128xf32>
    %8 = tpu.matmul %6, %7, %cst_6 {dimension_numbers = #tpu.dot_dimension_numbers<[1], [0], [0], [1], [0, 0, 1, 1], [], []>} : vector<8x64xbf16>, vector<64x128xbf16>, vector<8x128xf32> -> vector<8x128xf32>
    %cst_7 = arith.constant 5.000000e-01 : f32
    %9 = vector.broadcast %cst_7 : f32 to vector<8x128xf32>
    %10 = arith.mulf %9, %8 : vector<8x128xf32>
    %11 = math.tanh %10 : vector<8x128xf32>
    %cst_8 = arith.constant 1.000000e+00 : f32
    %12 = vector.broadcast %cst_8 : f32 to vector<8x128xf32>
    %13 = arith.addf %11, %12 : vector<8x128xf32>
    %cst_9 = arith.constant 5.000000e-01 : f32
    %14 = vector.broadcast %cst_9 : f32 to vector<8x128xf32>
    %15 = arith.mulf %14, %13 : vector<8x128xf32>
    %c0_10 = arith.constant 0 : index
    %c0_11 = arith.constant 0 : index
    %16 = vector.load %arg4[%c0_10, %c0_11] : memref<8x128xf32, #tpu.memory_space<vmem>>, vector<8x128xf32>
    tpu.vector_store %arg4[%c0_10, %c0_11], %15 {strides = array<i32>} : memref<8x128xf32, #tpu.memory_space<vmem>>, vector<8x128xf32>,
    return
  }
  func.func @transform_0(%arg0: i32) -> (i32, i32) {
    %c0_i32 = arith.constant 0 : i32
    %c0_i32_0 = arith.constant 0 : i32
    return %arg0, %c0_i32 : i32, i32
  }
  func.func @transform_1(%arg0: i32) -> (i32, i32) {
    %c0_i32 = arith.constant 0 : i32
    %c0_i32_0 = arith.constant 0 : i32
    %c0_i32_1 = arith.constant 0 : i32
    return %c0_i32, %c0_i32_0 : i32, i32
  }
  func.func @transform_2(%arg0: i32) -> (i32, i32) {
    %c0_i32 = arith.constant 0 : i32
    %c0_i32_0 = arith.constant 0 : i32
    %c0_i32_1 = arith.constant 0 : i32
    return %c0_i32, %c0_i32_0 : i32, i32
  }
  func.func @transform_3(%arg0: i32) -> (i32, i32) {
    %c0_i32 = arith.constant 0 : i32
    %c0_i32_0 = arith.constant 0 : i32
    return %c0_i32, %arg0 : i32, i32
  }
}

</mosaic_0001>

<llo_original>
// kernel: bnn_kl_forward.1
$region0: #{bnn_kl_forward.1}
  #allocation0 [shape = 'u32[]', space=smem, size = 0x4, offset = 0x4, fixed_abs, tag = 'smem constant byte address 0x4 - core index']
  #allocation1 [shape = 'u32[72,128]{1,0:T(1,128)}', space=vmem, size = 0x9000, scoped, tag = 'internal scratch']
  %s0 = inlined_call_operand.vmem [shape: f32[256,32], index: 0, kind: input, shape index: {}]
  %s1 = inlined_call_operand.vmem [shape: bf16[64,32], index: 1, kind: input, shape index: {}]
  %s2 = inlined_call_operand.vmem [shape: bf16[8,64], index: 2, kind: input, shape index: {}]
  %s3 = inlined_call_operand.hbm [shape: f32[8,256], index: 3, kind: output, shape index: {}]
  %s4 = sld [smem:[#allocation0]]
  $region45: #{bnn_kl_forward.1} parent=0
    _
  %s6 = ssub.s32 1, %s4
  %s7 = scalar_select 0, %s6, %s4
  $region1: #{bnn_kl_forward.1} parent=0
    #allocation2 [shape = 'u8[8192]{0}', space=vmem, size = 0x2000, scoped, tag = 'output window, operand 0']
    #allocation3 [shape = 's32[2]{0}', space=sflag, size = 0x8, scoped, tag = 'scoped memory for bnn_kl_forward.1']
    %8 = vsyncpa [#allocation3], 0
    %s9 = scalar_lea.sflag [#allocation3], 1
    %10 = vsyncpa %s9, 0
    loop: start=0, step=1, limit=4
    $region2: #{bnn_kl_forward.1} parent=1 // loop_pre_header
      _
    $region3: #{bnn_kl_forward.1} parent=1 // loop_header
      %s12 = sphi 0, %s16
      %p13 = scmp.ge.s32.totalorder %s12, 4
      %s22 = sphi 0, %s24
      %s25 = sphi 0, %s22
      %s26 = sphi 0, %s25
      %s42 = sphi 0, %s26
      %s46 = sphi 0, %s46
      %s48 = sphi 0, %s46
      %s49 = sphi 0, %s48
      %s63 = sphi 0, %s49
      %s67 = sphi 0, %s67
      %s69 = sphi 0, %s67
      %s70 = sphi 0, %s69
      %s84 = sphi 0, %s70
      %s90 = sphi 0, %s92
      %s93 = sphi 0, %s90
      %s94 = sphi 0, %s93
      %s110 = sphi 0, %s94
    $region4: #{bnn_kl_forward.1} parent=1 // loop_header_branch
      %15 = sbr.rel (%p13) target = $region8
    $region5: #{bnn_kl_forward.1} parent=1 // loop_body
      %s17 = ssub.s32 %s12, 1
      %s18 = ssub.s32 %s12, 2
      %s19 = sadd.s32 %s12, 1
      %s20 = ssub.s32 %s12, %s19
      %p21 = scmp.eq.s32.totalorder %s20, 0
      %s23 = sadd.s32 %s22, 1
      %s24 = scalar_select %p21, %s22, %s23
      %p27 = pneg %p21
      %p28 = scmp.eq.s32.totalorder %s12, 1
      %p29 = por %p27, %p28
      %p30 = scmp.ne.s32.totalorder %s22, %s25
      %p31 = scmp.eq.s32.totalorder %s12, 0
      %p32 = por %p30, %p31
      %p33 = scmp.ne.s32.totalorder %s22, %s25
      %p34 = scmp.eq.s32.totalorder %s17, 1
      %p35 = por %p33, %p34
      %p36 = scmp.ne.s32.totalorder %s25, %s26
      %p37 = scmp.eq.s32.totalorder %s17, 0
      %p38 = por %p36, %p37
      %p39 = scmp.ne.s32.totalorder %s25, %s26
      %p40 = scmp.eq.s32.totalorder %s18, 1
      %p41 = por %p39, %p40
      %p43 = scmp.ne.s32.totalorder %s26, %s42
      %p44 = scmp.eq.s32.totalorder %s18, 0
      %p45 = por %p43, %p44
      %s47 = sadd.s32 %s46, 1
      %p50 = scmp.eq.s32.totalorder %s12, 1
      %p51 = scmp.ne.s32.totalorder %s46, %s48
      %p52 = scmp.eq.s32.totalorder %s12, 0
      %p53 = por %p51, %p52
      %p54 = scmp.ne.s32.totalorder %s46, %s48
      %p55 = scmp.eq.s32.totalorder %s17, 1
      %p56 = por %p54, %p55
      %p57 = scmp.ne.s32.totalorder %s48, %s49
      %p58 = scmp.eq.s32.totalorder %s17, 0
      %p59 = por %p57, %p58
      %p60 = scmp.ne.s32.totalorder %s48, %s49
      %p61 = scmp.eq.s32.totalorder %s18, 1
      %p62 = por %p60, %p61
      %p64 = scmp.ne.s32.totalorder %s49, %s63
      %p65 = scmp.eq.s32.totalorder %s18, 0
      %p66 = por %p64, %p65
      %s68 = sadd.s32 %s67, 1
      %p71 = scmp.eq.s32.totalorder %s12, 1
      %p72 = scmp.ne.s32.totalorder %s67, %s69
      %p73 = scmp.eq.s32.totalorder %s12, 0
      %p74 = por %p72, %p73
      %p75 = scmp.ne.s32.totalorder %s67, %s69
      %p76 = scmp.eq.s32.totalorder %s17, 1
      %p77 = por %p75, %p76
      %p78 = scmp.ne.s32.totalorder %s69, %s70
      %p79 = scmp.eq.s32.totalorder %s17, 0
      %p80 = por %p78, %p79
      %p81 = scmp.ne.s32.totalorder %s69, %s70
      %p82 = scmp.eq.s32.totalorder %s18, 1
      %p83 = por %p81, %p82
      %p85 = scmp.ne.s32.totalorder %s70, %s84
      %p86 = scmp.eq.s32.totalorder %s18, 0
      %p87 = por %p85, %p86
      %s88 = ssub.s32 %s12, %s19
      %p89 = scmp.eq.s32.totalorder %s88, 0
      %s91 = sadd.s32 %s90, 1
      %s92 = scalar_select %p89, %s90, %s91
      %p95 = pneg %p89
      %p96 = scmp.eq.s32.totalorder %s12, 1
      %p97 = por %p95, %p96
      %p98 = scmp.ne.s32.totalorder %s90, %s93
      %p99 = scmp.eq.s32.totalorder %s12, 0
      %p100 = por %p98, %p99
      %p101 = scmp.ne.s32.totalorder %s90, %s93
      %p102 = scmp.eq.s32.totalorder %s17, 1
      %p103 = por %p101, %p102
      %p104 = scmp.ne.s32.totalorder %s93, %s94
      %p105 = scmp.eq.s32.totalorder %s17, 0
      %p106 = por %p104, %p105
      %p107 = scmp.ne.s32.totalorder %s93, %s94
      %p108 = scmp.eq.s32.totalorder %s18, 1
      %p109 = por %p107, %p108
      %p111 = scmp.ne.s32.totalorder %s94, %s110
      %p112 = scmp.eq.s32.totalorder %s18, 0
      %p113 = por %p111, %p112
      %p114 = scmp.le.s32.totalorder 1, %s12
      %p115 = scmp.lt.s32.totalorder %s12, 3
      %p116 = pnand %p114, %p115
      %p117 = pneg %p116
      // Predicated region
      $region9: #{bnn_kl_forward.1} parent=5 // pred_check
        _
      $region10: #{bnn_kl_forward.1} parent=5 // pred_check_branch
        %119 = sbr.rel (%p116) target = $region12
      $region11: #{bnn_kl_forward.1} parent=5 // pred_region
        %s120 = ssub.s32 %s12, 1
        // Predicated region
        $region13: #{bnn_kl_forward.1} parent=11 // pred_check
          %p121 = pneg %p59
        $region14: #{bnn_kl_forward.1} parent=11 // pred_check_branch
          %123 = sbr.rel (%p121) target = $region16
        $region15: #{bnn_kl_forward.1} parent=11 // pred_region
          _
        $region16: #{bnn_kl_forward.1} parent=11 // pred_fallthru
          _
        // Predicated region
        $region17: #{bnn_kl_forward.1} parent=11 // pred_check
          %p124 = pneg %p80
        $region18: #{bnn_kl_forward.1} parent=11 // pred_check_branch
          %126 = sbr.rel (%p124) target = $region20
        $region19: #{bnn_kl_forward.1} parent=11 // pred_region
          _
        $region20: #{bnn_kl_forward.1} parent=11 // pred_fallthru
          _
      $region12: #{bnn_kl_forward.1} parent=5 // pred_fallthru
        _
      %p127 = scmp.lt.s32.totalorder %s12, 2
      // Predicated region
      $region21: #{bnn_kl_forward.1} parent=5 // pred_check
        %p128 = pneg %p127
      $region22: #{bnn_kl_forward.1} parent=5 // pred_check_branch
        %130 = sbr.rel (%p128) target = $region24
      $region23: #{bnn_kl_forward.1} parent=5 // pred_region
        // Predicated region
        $region25: #{bnn_kl_forward.1} parent=23 // pred_check
          %p131 = pneg %p32
        $region26: #{bnn_kl_forward.1} parent=23 // pred_check_branch
          %133 = sbr.rel (%p131) target = $region28
        $region27: #{bnn_kl_forward.1} parent=23 // pred_region
          %s134 = smul.u32 16, %s12
          %p135 = scmp.lt.s32.totalorder %s134, 31
          %s136 = scalar_select %p135, %s134, 31
          %s137 = smul.addr %s136, 8
          %s138 = scalar_lea.vmem %s0, %s137
          %s139 = smul.u32 16, %s12
        $region28: #{bnn_kl_forward.1} parent=23 // pred_fallthru
          _
      $region24: #{bnn_kl_forward.1} parent=5 // pred_fallthru
        _
      %p140 = scmp.le.s32.totalorder 1, %s12
      %p141 = scmp.lt.s32.totalorder %s12, 3
      %p142 = pnand %p140, %p141
      %p143 = pneg %p142
      // Predicated region
      $region29: #{bnn_kl_forward.1} parent=5 // pred_check
        _
      $region30: #{bnn_kl_forward.1} parent=5 // pred_check_branch
        %145 = sbr.rel (%p142) target = $region32
      $region31: #{bnn_kl_forward.1} parent=5 // pred_region
        %s146 = ssub.s32 %s12, 1
        %s147 = smul.u32 16, %s17
        %p148 = scmp.lt.s32.totalorder %s147, 31
        %s149 = scalar_select %p148, %s147, 31
        %s150 = smul.addr %s149, 8
        %s151 = scalar_lea.vmem %s0, %s150
        %p152 = pneg %p38
        %p153 = pneg %p35
        %p154 = pneg %p59
        %p155 = pneg %p56
        %p156 = pneg %p80
        %p157 = pneg %p77
        %p158 = pneg %p106
        %p159 = pneg %p103
        %s160 = sand.u32 %s93, 1
        %s161 = scalar_lea.sflag [#allocation3], %s160
        %s162 = sand.u32 %s93, 1
        %s163 = smul.addr %s162, 8
        %s164 = scalar_lea.vmem [#allocation2], %s163
        %s165 = smul.u32 16, %s17
        %p166 = scmp.lt.s32.totalorder %s165, 31
        %s167 = scalar_select %p166, %s165, 31
        %s168 = smul.addr %s167, 8
        %s169 = scalar_lea.vmem %s0, %s168
        %s170 = smul.u32 16, %s17
        %v172 = vld [vmem:[%s1] sm:$0xf]
        %v173 = vld [vmem:[%s1 + $0x4] sm:$0xf]
        %v174 = vld [vmem:[%s1 + $0x8] sm:$0xf]
        %v175 = vld [vmem:[%s1 + $0xc] sm:$0xf]
        %v176 = vld [vmem:[%s1 + $0x10] sm:$0xf]
        %v177 = vld [vmem:[%s1 + $0x14] sm:$0xf]
        %v178 = vld [vmem:[%s1 + $0x18] sm:$0xf]
        %v179 = vld [vmem:[%s1 + $0x1c] sm:$0xf]
        %v180 = vld [vmem:[%s169] sm:$0xff]
        %v181 = vld [vmem:[%s169 + $0x8] sm:$0xff]
        %v182 = vld [vmem:[%s169 + $0x10] sm:$0xff]
        %v183 = vld [vmem:[%s169 + $0x18] sm:$0xff]
        %v184 = vld [vmem:[%s169 + $0x20] sm:$0xff]
        %v185 = vld [vmem:[%s169 + $0x28] sm:$0xff]
        %v186 = vld [vmem:[%s169 + $0x30] sm:$0xff]
        %v187 = vld [vmem:[%s169 + $0x38] sm:$0xff]
        %v188 = vld [vmem:[%s169 + $0x40] sm:$0xff]
        %v189 = vld [vmem:[%s169 + $0x48] sm:$0xff]
        %v190 = vld [vmem:[%s169 + $0x50] sm:$0xff]
        %v191 = vld [vmem:[%s169 + $0x58] sm:$0xff]
        %v192 = vld [vmem:[%s169 + $0x60] sm:$0xff]
        %v193 = vld [vmem:[%s169 + $0x68] sm:$0xff]
        %v194 = vld [vmem:[%s169 + $0x70] sm:$0xff]
        %v195 = vld [vmem:[%s169 + $0x78] sm:$0xff]
        %v196 = vpack.c.bf16 %v181, %v180
        %v197 = vpack.c.bf16 %v183, %v182
        %v198 = vpack.c.bf16 %v185, %v184
        %v199 = vpack.c.bf16 %v187, %v186
        %v200 = vpack.c.bf16 %v189, %v188
        %v201 = vpack.c.bf16 %v191, %v190
        %v202 = vpack.c.bf16 %v193, %v192
        %v203 = vpack.c.bf16 %v195, %v194
        %v212 = vunpack.c.l.b16 %v172
        %v213 = vunpack.c.l.b16 %v173
        %v214 = vunpack.c.l.b16 %v174
        %v215 = vunpack.c.l.b16 %v175
        %v216 = vunpack.c.l.b16 %v176
        %v217 = vunpack.c.l.b16 %v177
        %v218 = vunpack.c.l.b16 %v178
        %v219 = vunpack.c.l.b16 %v179
        %v220 = vpack.c.b16 %v213, %v212
        %v221 = vpack.c.b16 %v215, %v214
        %v222 = vpack.c.b16 %v217, %v216
        %v223 = vpack.c.b16 %v219, %v218
        %vm224 = vcmask 261120
        %v226 = vsel %vm224, %v220, 0
        %v229 = vsel %vm224, %v221, 0
        %v232 = vsel %vm224, %v222, 0
        %v235 = vsel %vm224, %v223, 0
        %v238 = vsel %vm224, %v196, 0
        %v241 = vsel %vm224, %v197, 0
        %v244 = vsel %vm224, %v198, 0
        %v247 = vsel %vm224, %v199, 0
        %v250 = vsel %vm224, %v200, 0
        %v253 = vsel %vm224, %v201, 0
        %v256 = vsel %vm224, %v202, 0
        %v259 = vsel %vm224, %v203, 0
        %261 = vmatpush.bf16.xpose.msra.mxu0 %v259
        %262 = vmatpush.bf16.xpose.msra.mxu0 %v256
        %263 = vmatpush.bf16.xpose.msra.mxu0 %v253
        %264 = vmatpush.bf16.xpose.msra.mxu0 %v250
        %265 = vmatpush.bf16.xpose.msra.mxu0 %v247
        %266 = vmatpush.bf16.xpose.msra.mxu0 %v244
        %267 = vmatpush.bf16.xpose.msra.mxu0 %v241
        %268 = vmatpush.bf16.xpose.msra.mxu0 %v238
        %269 = vmatmul.bf16.gmra.mxu0 %v226
        %v270 = vpop.f32.mrf.mxu0
        %v271 = vadd.f32 0.0, %v270
        %v272 = vpop.f32.mrf.mxu0
        %v273 = vadd.f32 0.0, %v272
        %274 = vmatmul.bf16.gmra.mxu0 %v229
        %v275 = vpop.f32.mrf.mxu0
        %v276 = vadd.f32 0.0, %v275
        %v277 = vpop.f32.mrf.mxu0
        %v278 = vadd.f32 0.0, %v277
        %279 = vmatmul.bf16.gmra.mxu0 %v232
        %v280 = vpop.f32.mrf.mxu0
        %v281 = vadd.f32 0.0, %v280
        %v282 = vpop.f32.mrf.mxu0
        %v283 = vadd.f32 0.0, %v282
        %284 = vmatmul.bf16.gmra.mxu0 %v235
        %v285 = vpop.f32.mrf.mxu0
        %v286 = vadd.f32 0.0, %v285
        %v287 = vpop.f32.mrf.mxu0
        %v288 = vadd.f32 0.0, %v287
        %289 = vdwg.mxu0
        %v290 = vmax.f32 %v271, 0.0
        %v291 = vmax.f32 %v273, 0.0
        %v292 = vmax.f32 %v276, 0.0
        %v293 = vmax.f32 %v278, 0.0
        %v294 = vmax.f32 %v281, 0.0
        %v295 = vmax.f32 %v283, 0.0
        %v296 = vmax.f32 %v286, 0.0
        %v297 = vmax.f32 %v288, 0.0
        %v298 = vld [vmem:[%s2] sm:$0xf]
        %v299 = vpack.c.bf16 %v291, %v290
        %v300 = vpack.c.bf16 %v293, %v292
        %v301 = vpack.c.bf16 %v295, %v294
        %v302 = vpack.c.bf16 %v297, %v296
        %vm303 = vcmask 523264
        %v305 = vsel %vm303, %v298, 0
        %307 = vmatpush.bf16.msra.mxu0 0
        %308 = vmatpush.bf16.msra.mxu0 0
        %309 = vmatpush.bf16.msra.mxu0 0
        %310 = vmatpush.bf16.msra.mxu0 0
        %311 = vmatpush.bf16.msra.mxu0 %v302
        %312 = vmatpush.bf16.msra.mxu0 %v301
        %313 = vmatpush.bf16.msra.mxu0 %v300
        %314 = vmatpush.bf16.msra.mxu0 %v299
        %315 = vmatmul.bf16.gmra.mxu0 %v305
        %v316 = vpop.f32.mrf.mxu0
        %v317 = vadd.f32 0.0, %v316
        %v318 = vpop.f32.mrf.mxu0
        %319 = vdwg.mxu0
        %v320 = vmul.f32 %v317, 0.5
        %v321 = vtanh.pop %v320
        %v322 = vadd.f32 %v321, 1.0
        %v323 = vmul.f32 %v322, 0.5
        %324 = vst [vmem:[%s164] sm:$0xff] %v323
        %s325 = sand.u32 %s93, 1
        %s326 = scalar_lea.sflag [#allocation3], %s325
        %s327 = sand.u32 %s93, 1
        %s328 = smul.addr %s327, 8
        %s329 = scalar_lea.vmem [#allocation2], %s328
        // Predicated region
        $region33: #{bnn_kl_forward.1} parent=31 // pred_check
          %p330 = pneg %p103
        $region34: #{bnn_kl_forward.1} parent=31 // pred_check_branch
          %332 = sbr.rel (%p330) target = $region36
        $region35: #{bnn_kl_forward.1} parent=31 // pred_region
          %334 = vsyncadd %s326, 0
          %s335 = smul.addr %s17, 8
          %s336 = scalar_lea.hbm %s3, %s335
          %s338 = sshll.u32 %s329, 4
          %s339 = int_to_ptr.vmem [resolvable:$true] %s338
          %s340 = sshll.u32 %s336, 4
          %s341 = int_to_ptr.hbm [resolvable:$true] %s340
          %343 = dma.vmem_to_hbm [thread:$0]  %s339, 128, %s341, %s326
        $region36: #{bnn_kl_forward.1} parent=31 // pred_fallthru
          _
      $region32: #{bnn_kl_forward.1} parent=5 // pred_fallthru
        _
      %p344 = scmp.le.s32.totalorder 2, %s12
      // Predicated region
      $region37: #{bnn_kl_forward.1} parent=5 // pred_check
        %p345 = pneg %p344
      $region38: #{bnn_kl_forward.1} parent=5 // pred_check_branch
        %347 = sbr.rel (%p345) target = $region40
      $region39: #{bnn_kl_forward.1} parent=5 // pred_region
        %s348 = ssub.s32 %s12, 2
        // Predicated region
        $region41: #{bnn_kl_forward.1} parent=39 // pred_check
          %p349 = pneg %p109
        $region42: #{bnn_kl_forward.1} parent=39 // pred_check_branch
          %351 = sbr.rel (%p349) target = $region44
        $region43: #{bnn_kl_forward.1} parent=39 // pred_region
          %s352 = sand.u32 %s94, 1
          %s353 = scalar_lea.sflag [#allocation3], %s352
          %s354 = sand.u32 %s94, 1
          %s355 = smul.addr %s354, 8
          %s356 = scalar_lea.vmem [#allocation2], %s355
          %358 = dma.done %s353, 128
        $region44: #{bnn_kl_forward.1} parent=39 // pred_fallthru
          _
      $region40: #{bnn_kl_forward.1} parent=5 // pred_fallthru
        _
    $region6: #{bnn_kl_forward.1} parent=1 // loop_footer
      %s16 = sadd.s32 1, %s12
    $region7: #{bnn_kl_forward.1} parent=1 // loop_footer_branch
      %11 = sbr.rel target = $region3
    $region8: #{bnn_kl_forward.1} parent=1 // loop_exit
      _
    %359 = vsyncpa [#allocation3], 1
    %s360 = scalar_lea.sflag [#allocation3], 1
    %361 = vsyncpa %s360, 1

</llo_original>
